<compile_context>
chip_gen: v7x
topology: tpu7x:2x2x1
jax: 0.10.0
libtpu: 0.0.40
codegen_flags: <defaults>
</compile_context>

<pallas_src>
import functools

import jax
import jax.numpy as jnp
from jax import lax
from jax.experimental import pallas as pl
from jax.experimental.pallas import tpu as pltpu

N_ATOMS = 1024  # fixed by the PyTorch module
C_TILE = 256    # channels per grid step (review: 2-4 tiles of 256-512)


def _synthesis_kernel(x_ref, at_ref, *rest, band_size, atom_size, window):
    # x_ref  : (C_TILE, full)        full = band_size * window, time on lanes
    # at_ref : (atom_size, C_TILE)   gain * atoms[:, 0, :].T (this tile's slice)
    # sel_ref: (full, band_size)     0/1 column selector (only when window > 1)
    # out_ref: (1, band_size)
    # acc_ref: (atom_size, full)     f32 accumulator, persists across c steps
    if window > 1:
        sel_ref, out_ref, acc_ref = rest
    else:
        out_ref, acc_ref = rest

    c = pl.program_id(1)
    full = band_size * window

    @pl.when(c == 0)
    def _():
        acc_ref[...] = jnp.zeros_like(acc_ref)

    xb = x_ref[...]                       # (C_TILE, full) f32
    at = at_ref[...]                      # (K, C_TILE)    f32

    # ---- MaxPool1d(window): running max over lane-rolled copies ----
    # m[c, i] = max_{0<=w<window} x[c, i+w]; the circular wrap only touches
    # columns that the stride-`window` selection below never reads.
    if window == 1:
        m = xb
    elif (window & (window - 1)) == 0:
        m = xb
        s = 1
        while s < window:                 # log2(window) doubling steps
            m = jnp.maximum(m, pltpu.roll(m, shift=full - s, axis=1))
            s *= 2
    else:
        m = xb
        for w in range(1, window):
            m = jnp.maximum(m, pltpu.roll(xb, shift=full - w, axis=1))

    # ---- channel contraction on the MXU, accumulated over channel tiles ----
    # acc[k, i] += sum_c at[k, c] * m[c, i]
    acc_ref[...] += jnp.dot(at, m, preferred_element_type=jnp.float32)

    # ---- epilogue: once per batch, on the last channel tile ----
    @pl.when(c == pl.num_programs(1) - 1)
    def _():
        acc = acc_ref[...]                                     # (K, full)
        if window > 1:
            # pick every window-th column: acc[k, t] = acc_full[k, t*window]
            acc = jnp.dot(acc, sel_ref[...],
                          preferred_element_type=jnp.float32)  # (K, band)
        # conv_transpose1d overlap-add: out[t] = sum_{k<=t} acc[k, t-k]
        # (strided XLU roll: row k rotated right by k)
        rolled = pltpu.roll(acc, shift=0, axis=1, stride=1, stride_axis=0)
        k_i = lax.broadcasted_iota(jnp.int32, (atom_size, band_size), 0)
        t_i = lax.broadcasted_iota(jnp.int32, (atom_size, band_size), 1)
        contrib = jnp.where(t_i >= k_i, rolled, 0.0)
        out_ref[...] = jnp.sum(contrib, axis=0,
                               keepdims=True).astype(out_ref.dtype)


def synthesis_band(x, atoms, gain, band_size):
    """x: (B, n_atoms, full_size) float32, PyTorch NCW layout (used as-is)."""
    B, C, full = x.shape
    n_atoms, _, atom_size = atoms.shape
    assert C == n_atoms
    # TODO(synk): full_size not divisible by band_size (MaxPool1d tail
    # truncation in torch) is not supported; exact divisibility asserted.
    assert full % band_size == 0
    window = full // band_size

    c_tile = min(C, C_TILE)
    assert C % c_tile == 0
    n_ct = C // c_tile

    # Fold the scalar gain into the atoms operand (drops the SMEM scalar and
    # the per-step broadcast multiply).
    at = (atoms[:, 0, :] * gain[0]).T.astype(jnp.float32)        # (K, C)

    kernel = functools.partial(_synthesis_kernel, band_size=band_size,
                               atom_size=atom_size, window=window)

    in_specs = [
        # per-(batch, channel-tile) x block, original NCW layout (no HBM
        # transpose in the wrapper)
        pl.BlockSpec((None, c_tile, full), lambda b, c: (b, c, 0)),
        # matching channel slice of gain*atoms.T
        pl.BlockSpec((atom_size, c_tile), lambda b, c: (0, c)),
    ]
    operands = [x, at]
    if window > 1:
        # grid-invariant 0/1 column-selection matrix (fetched once)
        sel = (jnp.arange(full, dtype=jnp.int32)[:, None]
               == window * jnp.arange(band_size, dtype=jnp.int32)[None, :]
               ).astype(jnp.float32)                             # (full, band)
        in_specs.append(pl.BlockSpec((full, band_size), lambda b, c: (0, 0)))
        operands.append(sel)

    out = pl.pallas_call(
        kernel,
        out_shape=jax.ShapeDtypeStruct((B, 1, band_size), jnp.float32),
        grid_spec=pltpu.PrefetchScalarGridSpec(
            num_scalar_prefetch=0,
            grid=(B, n_ct),
            in_specs=in_specs,
            # output block revisited across the "arbitrary" c axis; written
            # only on the last c step
            out_specs=pl.BlockSpec((None, 1, band_size), lambda b, c: (b, 0, 0)),
            scratch_shapes=[pltpu.VMEM((atom_size, full), jnp.float32)],
        ),
        compiler_params=pltpu.CompilerParams(
            dimension_semantics=("parallel", "arbitrary")),
    )(*operands)
    return out


def reference(x, atoms, gain, band_size):
    """Pure-JAX replica of the PyTorch forward."""
    B, C, full = x.shape
    window = full // band_size
    down = x if window == 1 else jnp.max(
        x.reshape(B, C, band_size, window), axis=-1)
    A = atoms[:, 0, :]
    K = A.shape[-1]
    M = jnp.einsum('bct,ck->btk', down, A)          # (B, band, K)
    out = jnp.zeros((B, band_size + K), jnp.float32)
    for k in range(K):
        out = out.at[:, k:k + band_size].add(M[:, :, k])
    return (out[:, :band_size] * gain[0])[:, None, :]


if __name__ == "__main__":
    band_size = 128
    atom_size = 16
    B = 2

    key = jax.random.PRNGKey(0)
    k1, k2, k3 = jax.random.split(key, 3)
    atoms = jax.random.uniform(k1, (N_ATOMS, 1, atom_size),
                               dtype=jnp.float32, minval=-1.0, maxval=1.0)
    gain = jnp.full((1,), 1.25, jnp.float32)   # non-trivial gain to test fold

    # case 1: full_size != band_size -> exercises the MaxPool1d branch
    x_big = jax.random.normal(k2, (B, N_ATOMS, 2 * band_size), dtype=jnp.float32)
    out_big = jax.block_until_ready(synthesis_band(x_big, atoms, gain, band_size))
    assert out_big.shape == (B, 1, band_size)
    ref_big = reference(x_big, atoms, gain, band_size)
    err = float(jnp.max(jnp.abs(out_big - ref_big)))
    scale = float(jnp.max(jnp.abs(ref_big))) + 1e-6
    assert err / scale < 1e-3, f"pooled case mismatch: {err} vs scale {scale}"

    # case 2: full_size == band_size -> no pooling
    x_eq = jax.random.normal(k3, (B, N_ATOMS, band_size), dtype=jnp.float32)
    out_eq = jax.block_until_ready(synthesis_band(x_eq, atoms, gain, band_size))
    ref_eq = reference(x_eq, atoms, gain, band_size)
    err = float(jnp.max(jnp.abs(out_eq - ref_eq)))
    scale = float(jnp.max(jnp.abs(ref_eq))) + 1e-6
    assert err / scale < 1e-3, f"no-pool case mismatch: {err} vs scale {scale}"

    print("KERNEL_OK")
</pallas_src>

<mosaic_0001>
module attributes {stable_mosaic.version = 11 : i64} {
  func.func @_synthesis_kernel(%arg0: i32, %arg1: i32, %arg2: memref<1x256x256xf32, #tpu.memory_space<vmem>>, %arg3: memref<16x256xf32, #tpu.memory_space<vmem>>, %arg4: memref<256x128xf32, #tpu.memory_space<vmem>>, %arg5: memref<1x1x128xf32, #tpu.memory_space<vmem>>, %arg6: memref<16x256xf32, #tpu.memory_space<vmem>>) attributes {dimension_semantics = [#tpu.dimension_semantics<parallel>, #tpu.dimension_semantics<arbitrary>], iteration_bounds = array<i64: 2, 4>, scalar_prefetch = 0 : i64, scratch_operands = 1 : i64, tpu.core_type = #tpu.core_type<tc>, window_params = [{transform_indices = @transform_0, window_bounds = array<i64: 1, 256, 256>}, {transform_indices = @transform_1, window_bounds = array<i64: 16, 256>}, {pipeline_mode = #tpu.pipeline_mode<synchronous>, transform_indices = @transform_2, window_bounds = array<i64: 256, 128>}, {transform_indices = @transform_3, window_bounds = array<i64: 1, 1, 128>}]} {
    %c0_i32 = arith.constant 0 : i32
    %0 = arith.cmpi eq, %arg1, %c0_i32 : i32
    %1 = arith.extui %0 : i1 to i32
    %c0_i32_0 = arith.constant 0 : i32
    %2 = arith.cmpi ne, %1, %c0_i32_0 : i32
    scf.if %2 {
      %cst_10 = arith.constant 0.000000e+00 : f32
      %15 = vector.broadcast %cst_10 : f32 to vector<16x256xf32>
      %c0_11 = arith.constant 0 : index
      %c0_12 = arith.constant 0 : index
      %16 = vector.load %arg6[%c0_11, %c0_12] : memref<16x256xf32, #tpu.memory_space<vmem>>, vector<16x256xf32>
      tpu.vector_store %arg6[%c0_11, %c0_12], %15 {strides = array<i32>} : memref<16x256xf32, #tpu.memory_space<vmem>>, vector<16x256xf32>,
    } else {
    }
    %c0 = arith.constant 0 : index
    %c0_1 = arith.constant 0 : index
    %c0_2 = arith.constant 0 : index
    %3 = vector.load %arg2[%c0, %c0_1, %c0_2] : memref<1x256x256xf32, #tpu.memory_space<vmem>>, vector<1x256x256xf32>
    %4 = vector.shape_cast %3 : vector<1x256x256xf32> to vector<256x256xf32>
    %c0_3 = arith.constant 0 : index
    %c0_4 = arith.constant 0 : index
    %5 = vector.load %arg3[%c0_3, %c0_4] : memref<16x256xf32, #tpu.memory_space<vmem>>, vector<16x256xf32>
    %c255_i32 = arith.constant 255 : i32
    %6 = tpu.dynamic_rotate %4 by %c255_i32 dim 1 : vector<256x256xf32>, i32 -> vector<256x256xf32>
    %7 = arith.maximumf %4, %6 : vector<256x256xf32>
    %c0_5 = arith.constant 0 : index
    %c0_6 = arith.constant 0 : index
    %8 = vector.load %arg6[%c0_5, %c0_6] : memref<16x256xf32, #tpu.memory_space<vmem>>, vector<16x256xf32>
    %cst = arith.constant dense<0.000000e+00> : vector<16x256xf32>
    %9 = tpu.matmul %5, %7, %cst {dimension_numbers = #tpu.dot_dimension_numbers<[1], [0], [0], [1], [0, 0, 1, 1], [], []>} : vector<16x256xf32>, vector<256x256xf32>, vector<16x256xf32> -> vector<16x256xf32>
    %10 = arith.addf %8, %9 : vector<16x256xf32>
    %c0_7 = arith.constant 0 : index
    %c0_8 = arith.constant 0 : index
    %11 = vector.load %arg6[%c0_7, %c0_8] : memref<16x256xf32, #tpu.memory_space<vmem>>, vector<16x256xf32>
    tpu.vector_store %arg6[%c0_7, %c0_8], %10 {strides = array<i32>} : memref<16x256xf32, #tpu.memory_space<vmem>>, vector<16x256xf32>,
    %c3_i32 = arith.constant 3 : i32
    %12 = arith.cmpi eq, %arg1, %c3_i32 : i32
    %13 = arith.extui %12 : i1 to i32
    %c0_i32_9 = arith.constant 0 : i32
    %14 = arith.cmpi ne, %13, %c0_i32_9 : i32
    scf.if %14 {
      %c0_10 = arith.constant 0 : index
      %c0_11 = arith.constant 0 : index
      %15 = vector.load %arg6[%c0_10, %c0_11] : memref<16x256xf32, #tpu.memory_space<vmem>>, vector<16x256xf32>
      %c0_12 = arith.constant 0 : index
      %c0_13 = arith.constant 0 : index
      %16 = vector.load %arg4[%c0_12, %c0_13] : memref<256x128xf32, #tpu.memory_space<vmem>>, vector<256x128xf32>
      %cst_14 = arith.constant dense<0.000000e+00> : vector<16x128xf32>
      %17 = tpu.matmul %15, %16, %cst_14 {dimension_numbers = #tpu.dot_dimension_numbers<[1], [0], [0], [1], [0, 0, 1, 1], [], []>} : vector<16x256xf32>, vector<256x128xf32>, vector<16x128xf32> -> vector<16x128xf32>
      %c0_i32_15 = arith.constant 0 : i32
      %18 = tpu.dynamic_rotate %17 by %c0_i32_15 dim 1 {stride = 1 : si32, stride_dimension = 0 : si32} : vector<16x128xf32>, i32 -> vector<16x128xf32>
      %19 = tpu.iota {dimensions = array<i32: 0>} : vector<16x128xi32>
      %20 = tpu.iota {dimensions = array<i32: 1>} : vector<16x128xi32>
      %21 = arith.cmpi sge, %20, %19 : vector<16x128xi32>
      %cst_16 = arith.constant 0.000000e+00 : f32
      %22 = vector.broadcast %cst_16 : f32 to vector<16x128xf32>
      %23 = arith.select %21, %18, %22 : vector<16x128xi1>, vector<16x128xf32>
      %cst_17 = arith.constant dense<0.000000e+00> : vector<128xf32>
      %24 = vector.multi_reduction <add>, %23, %cst_17 [0] : vector<16x128xf32> to vector<128xf32>
      %25 = vector.shape_cast %24 : vector<128xf32> to vector<1x128xf32>
      %c0_18 = arith.constant 0 : index
      %c0_19 = arith.constant 0 : index
      %c0_20 = arith.constant 0 : index
      %26 = vector.load %arg5[%c0_18, %c0_19, %c0_20] : memref<1x1x128xf32, #tpu.memory_space<vmem>>, vector<1x1x128xf32>
      %27 = vector.shape_cast %26 : vector<1x1x128xf32> to vector<1x128xf32>
      %28 = vector.shape_cast %25 : vector<1x128xf32> to vector<1x1x128xf32>
      tpu.vector_store %arg5[%c0_18, %c0_19, %c0_20], %28 {strides = array<i32>} : memref<1x1x128xf32, #tpu.memory_space<vmem>>, vector<1x1x128xf32>,
    } else {
    }
    return
  }
  func.func @transform_0(%arg0: i32, %arg1: i32) -> (i32, i32, i32) {
    %c0_i32 = arith.constant 0 : i32
    %c0_i32_0 = arith.constant 0 : i32
    return %arg0, %arg1, %c0_i32 : i32, i32, i32
  }
  func.func @transform_1(%arg0: i32, %arg1: i32) -> (i32, i32) {
    %c0_i32 = arith.constant 0 : i32
    %c0_i32_0 = arith.constant 0 : i32
    return %c0_i32, %arg1 : i32, i32
  }
  func.func @transform_2(%arg0: i32, %arg1: i32) -> (i32, i32) {
    %c0_i32 = arith.constant 0 : i32
    %c0_i32_0 = arith.constant 0 : i32
    %c0_i32_1 = arith.constant 0 : i32
    return %c0_i32, %c0_i32_0 : i32, i32
  }
  func.func @transform_3(%arg0: i32, %arg1: i32) -> (i32, i32, i32) {
    %c0_i32 = arith.constant 0 : i32
    %c0_i32_0 = arith.constant 0 : i32
    %c0_i32_1 = arith.constant 0 : i32
    return %arg0, %c0_i32, %c0_i32_0 : i32, i32, i32
  }
}

</mosaic_0001>

<llo_original>
// kernel: tpu_custom_call.1
$region0: #{tpu_custom_call.1}
  #allocation0 [shape = 'u32[]', space=smem, size = 0x4, offset = 0x4, fixed_abs, tag = 'smem constant byte address 0x4 - core index']
  #allocation1 [shape = 'u32[144,128]{1,0:T(1,128)}', space=vmem, size = 0x12000, scoped, tag = 'internal scratch']
  #allocation2 [shape = 'f32[16,256]{1,0:T(8,128)}', space=vmem, size = 0x4000, scoped, tag = 'scratch operand']
  %s0 = inlined_call_operand.hbm [shape: f32[2,1024,256], index: 0, kind: input, shape index: {}]
  %s1 = inlined_call_operand.hbm [shape: f32[16,1024], index: 1, kind: input, shape index: {}]
  %s2 = inlined_call_operand.hbm [shape: f32[256,128], index: 2, kind: input, shape index: {}]
  %s3 = inlined_call_operand.hbm [shape: f32[2,1,128], index: 3, kind: output, shape index: {}]
  %s4 = sld [smem:[#allocation0]]
  $region65: #{tpu_custom_call.1} parent=0
    _
  %s6 = ssub.s32 1, %s4
  %s7 = scalar_select 0, %s6, %s4
  $region1: #{tpu_custom_call.1} parent=0
    #allocation3 [shape = 'u8[524288]{0}', space=vmem, size = 0x80000, scoped, tag = 'input window, operand 0']
    #allocation4 [shape = 's32[2]{0}', space=sflag, size = 0x8, scoped, tag = 'scoped memory for tpu_custom_call.1']
    #allocation5 [shape = 's32[2]{0}', space=sflag, size = 0x8, scoped, tag = 'scoped memory for tpu_custom_call.1']
    #allocation6 [shape = 'u8[32768]{0}', space=vmem, size = 0x8000, scoped, tag = 'input window, operand 1']
    #allocation7 [shape = 's32[2]{0}', space=sflag, size = 0x8, scoped, tag = 'scoped memory for tpu_custom_call.1']
    #allocation8 [shape = 'u8[131072]{0}', space=vmem, size = 0x20000, scoped, tag = 'input window, operand 2, single buffered']
    #allocation9 [shape = 'u8[1024]{0}', space=vmem, size = 0x400, scoped, tag = 'output window, operand 0']
    %8 = vsyncpa [#allocation4], 0
    %s9 = scalar_lea.sflag [#allocation4], 1
    %10 = vsyncpa %s9, 0
    %11 = vsyncpa [#allocation7], 0
    %s12 = scalar_lea.sflag [#allocation7], 1
    %13 = vsyncpa %s12, 0
    %14 = vsyncpa [#allocation5], 0
    %s15 = scalar_lea.sflag [#allocation5], 1
    %16 = vsyncpa %s15, 0
    loop: start=0, step=1, limit=10
    $region2: #{tpu_custom_call.1} parent=1 // loop_pre_header
      _
    $region3: #{tpu_custom_call.1} parent=1 // loop_header
      %s18 = sphi 0, %s22
      %p19 = scmp.ge.s32.totalorder %s18, 10
      %s25 = sphi 0, %s37
      %s26 = sphi 0, %s33
      %s27 = sphi 0, %s25
      %s28 = sphi 0, %s26
      %s29 = sphi 0, %s27
      %s30 = sphi 0, %s28
      %s42 = sphi 0, %s44
      %s45 = sphi 0, %s42
      %s46 = sphi 0, %s45
      %s62 = sphi 0, %s46
      %s68 = sphi 0, %s70
      %s71 = sphi 0, %s68
      %s72 = sphi 0, %s71
      %s88 = sphi 0, %s72
      %s92 = sphi 0, %s92
      %s94 = sphi 0, %s92
      %s95 = sphi 0, %s94
      %s109 = sphi 0, %s95
      %s115 = sphi 0, %s117
      %s118 = sphi 0, %s115
      %s119 = sphi 0, %s118
      %s135 = sphi 0, %s119
    $region4: #{tpu_custom_call.1} parent=1 // loop_header_branch
      %21 = sbr.rel (%p19) target = $region8
    $region5: #{tpu_custom_call.1} parent=1 // loop_body
      %s23 = ssub.s32 %s18, 1
      %s24 = ssub.s32 %s18, 2
      %s31 = sadd.s32 1, %s26
      %p32 = scmp.ge.s32.totalorder %s31, 4
      %s33 = scalar_select %p32, 0, %s31
      %s34 = sadd.s32 1, %s25
      %s35 = scalar_select %p32, %s34, %s25
      %p36 = scmp.ge.s32.totalorder %s35, 2
      %s37 = scalar_select %p36, 0, %s35
      %s38 = ssub.s32 %s25, %s37
      %s39 = ssub.s32 %s26, %s33
      %s40 = sor.u32 %s38, %s39
      %p41 = scmp.eq.s32.totalorder %s40, 0
      %s43 = sadd.s32 %s42, 1
      %s44 = scalar_select %p41, %s42, %s43
      %p47 = pneg %p41
      %p48 = scmp.eq.s32.totalorder %s18, 7
      %p49 = por %p47, %p48
      %p50 = scmp.ne.s32.totalorder %s42, %s45
      %p51 = scmp.eq.s32.totalorder %s18, 0
      %p52 = por %p50, %p51
      %p53 = scmp.ne.s32.totalorder %s42, %s45
      %p54 = scmp.eq.s32.totalorder %s23, 7
      %p55 = por %p53, %p54
      %p56 = scmp.ne.s32.totalorder %s45, %s46
      %p57 = scmp.eq.s32.totalorder %s23, 0
      %p58 = por %p56, %p57
      %p59 = scmp.ne.s32.totalorder %s45, %s46
      %p60 = scmp.eq.s32.totalorder %s24, 7
      %p61 = por %p59, %p60
      %p63 = scmp.ne.s32.totalorder %s46, %s62
      %p64 = scmp.eq.s32.totalorder %s24, 0
      %p65 = por %p63, %p64
      %s66 = ssub.s32 %s26, %s33
      %p67 = scmp.eq.s32.totalorder %s66, 0
      %s69 = sadd.s32 %s68, 1
      %s70 = scalar_select %p67, %s68, %s69
      %p73 = pneg %p67
      %p74 = scmp.eq.s32.totalorder %s18, 7
      %p75 = por %p73, %p74
      %p76 = scmp.ne.s32.totalorder %s68, %s71
      %p77 = scmp.eq.s32.totalorder %s18, 0
      %p78 = por %p76, %p77
      %p79 = scmp.ne.s32.totalorder %s68, %s71
      %p80 = scmp.eq.s32.totalorder %s23, 7
      %p81 = por %p79, %p80
      %p82 = scmp.ne.s32.totalorder %s71, %s72
      %p83 = scmp.eq.s32.totalorder %s23, 0
      %p84 = por %p82, %p83
      %p85 = scmp.ne.s32.totalorder %s71, %s72
      %p86 = scmp.eq.s32.totalorder %s24, 7
      %p87 = por %p85, %p86
      %p89 = scmp.ne.s32.totalorder %s72, %s88
      %p90 = scmp.eq.s32.totalorder %s24, 0
      %p91 = por %p89, %p90
      %s93 = sadd.s32 %s92, 1
      %p96 = scmp.eq.s32.totalorder %s18, 7
      %p97 = scmp.ne.s32.totalorder %s92, %s94
      %p98 = scmp.eq.s32.totalorder %s18, 0
      %p99 = por %p97, %p98
      %p100 = scmp.ne.s32.totalorder %s92, %s94
      %p101 = scmp.eq.s32.totalorder %s23, 7
      %p102 = por %p100, %p101
      %p103 = scmp.ne.s32.totalorder %s94, %s95
      %p104 = scmp.eq.s32.totalorder %s23, 0
      %p105 = por %p103, %p104
      %p106 = scmp.ne.s32.totalorder %s94, %s95
      %p107 = scmp.eq.s32.totalorder %s24, 7
      %p108 = por %p106, %p107
      %p110 = scmp.ne.s32.totalorder %s95, %s109
      %p111 = scmp.eq.s32.totalorder %s24, 0
      %p112 = por %p110, %p111
      %s113 = ssub.s32 %s25, %s37
      %p114 = scmp.eq.s32.totalorder %s113, 0
      %s116 = sadd.s32 %s115, 1
      %s117 = scalar_select %p114, %s115, %s116
      %p120 = pneg %p114
      %p121 = scmp.eq.s32.totalorder %s18, 7
      %p122 = por %p120, %p121
      %p123 = scmp.ne.s32.totalorder %s115, %s118
      %p124 = scmp.eq.s32.totalorder %s18, 0
      %p125 = por %p123, %p124
      %p126 = scmp.ne.s32.totalorder %s115, %s118
      %p127 = scmp.eq.s32.totalorder %s23, 7
      %p128 = por %p126, %p127
      %p129 = scmp.ne.s32.totalorder %s118, %s119
      %p130 = scmp.eq.s32.totalorder %s23, 0
      %p131 = por %p129, %p130
      %p132 = scmp.ne.s32.totalorder %s118, %s119
      %p133 = scmp.eq.s32.totalorder %s24, 7
      %p134 = por %p132, %p133
      %p136 = scmp.ne.s32.totalorder %s119, %s135
      %p137 = scmp.eq.s32.totalorder %s24, 0
      %p138 = por %p136, %p137
      %p139 = scmp.le.s32.totalorder 1, %s18
      %p140 = scmp.lt.s32.totalorder %s18, 9
      %p141 = pnand %p139, %p140
      %p142 = pneg %p141
      // Predicated region
      $region9: #{tpu_custom_call.1} parent=5 // pred_check
        _
      $region10: #{tpu_custom_call.1} parent=5 // pred_check_branch
        %144 = sbr.rel (%p141) target = $region12
      $region11: #{tpu_custom_call.1} parent=5 // pred_region
        %s145 = ssub.s32 %s18, 1
        // Predicated region
        $region13: #{tpu_custom_call.1} parent=11 // pred_check
          %p146 = pneg %p105
        $region14: #{tpu_custom_call.1} parent=11 // pred_check_branch
          %148 = sbr.rel (%p146) target = $region16
        $region15: #{tpu_custom_call.1} parent=11 // pred_region
          %s150 = ssub.s32 4096, 4096
          %151 = vsyncadd [#allocation7], %s150
          %s152 = sshll.u32 [#allocation8], 4
          %s153 = int_to_ptr.vmem [resolvable:$true] %s152
          %158 = dma.hbm_to_vmem [thread:$0]  %s2, 4096, %s153, [#allocation7], 128, 128, 8
        $region16: #{tpu_custom_call.1} parent=11 // pred_fallthru
          _
      $region12: #{tpu_custom_call.1} parent=5 // pred_fallthru
        _
      %p159 = scmp.lt.s32.totalorder %s18, 8
      // Predicated region
      $region17: #{tpu_custom_call.1} parent=5 // pred_check
        %p160 = pneg %p159
      $region18: #{tpu_custom_call.1} parent=5 // pred_check_branch
        %162 = sbr.rel (%p160) target = $region20
      $region19: #{tpu_custom_call.1} parent=5 // pred_region
        // Predicated region
        $region21: #{tpu_custom_call.1} parent=19 // pred_check
          %p163 = pneg %p52
        $region22: #{tpu_custom_call.1} parent=19 // pred_check_branch
          %165 = sbr.rel (%p163) target = $region24
        $region23: #{tpu_custom_call.1} parent=19 // pred_region
          %s166 = sand.u32 %s42, 1
          %s167 = scalar_lea.sflag [#allocation4], %s166
          %s168 = sand.u32 %s42, 1
          %s169 = smul.addr %s168, 512
          %s170 = scalar_lea.vmem [#allocation3], %s169
          %s171 = smul.u32 32, %s26
          %s173 = ssub.s32 8192, 8192
          %174 = vsyncadd %s167, %s173
          %s175 = smul.addr %s171, 2
          %s176 = smul.addr %s25, 256
          %s177 = sadd.s32 %s175, %s176
          %s178 = smul.addr %s177, 128
          %s179 = scalar_lea.hbm %s0, %s178
          %s180 = sshll.u32 %s170, 4
          %s181 = int_to_ptr.vmem [resolvable:$true] %s180
          %186 = dma.hbm_to_vmem [thread:$0]  %s179, 8192, %s181, %s167, 256, 256, 16
        $region24: #{tpu_custom_call.1} parent=19 // pred_fallthru
          _
        // Predicated region
        $region25: #{tpu_custom_call.1} parent=19 // pred_check
          %p187 = pneg %p78
        $region26: #{tpu_custom_call.1} parent=19 // pred_check_branch
          %189 = sbr.rel (%p187) target = $region28
        $region27: #{tpu_custom_call.1} parent=19 // pred_region
          %s190 = sand.u32 %s18, 1
          %s191 = scalar_lea.sflag [#allocation7], %s190
          %s192 = sand.u32 %s68, 1
          %s193 = smul.addr %s192, 32
          %s194 = scalar_lea.vmem [#allocation6], %s193
          %s195 = smul.u32 2, %s26
          %s197 = ssub.s32 512, 512
          %198 = vsyncadd %s191, %s197
          %s199 = smul.addr %s195, 128
          %s200 = scalar_lea.hbm %s1, %s199
          %s201 = sshll.u32 %s194, 4
          %s202 = int_to_ptr.vmem [resolvable:$true] %s201
          %207 = dma.hbm_to_vmem [thread:$0]  %s200, 512, %s202, %s191, 1024, 256, 16
        $region28: #{tpu_custom_call.1} parent=19 // pred_fallthru
          _
      $region20: #{tpu_custom_call.1} parent=5 // pred_fallthru
        _
      %p208 = scmp.le.s32.totalorder 1, %s18
      %p209 = scmp.lt.s32.totalorder %s18, 9
      %p210 = pnand %p208, %p209
      %p211 = pneg %p210
      // Predicated region
      $region29: #{tpu_custom_call.1} parent=5 // pred_check
        _
      $region30: #{tpu_custom_call.1} parent=5 // pred_check_branch
        %213 = sbr.rel (%p210) target = $region32
      $region31: #{tpu_custom_call.1} parent=5 // pred_region
        %s214 = ssub.s32 %s18, 1
        %s215 = sand.u32 %s45, 1
        %s216 = scalar_lea.sflag [#allocation4], %s215
        %s217 = sand.u32 %s45, 1
        %s218 = smul.addr %s217, 512
        %s219 = scalar_lea.vmem [#allocation3], %s218
        // Predicated region
        $region33: #{tpu_custom_call.1} parent=31 // pred_check
          %p220 = pneg %p58
        $region34: #{tpu_custom_call.1} parent=31 // pred_check_branch
          %222 = sbr.rel (%p220) target = $region36
        $region35: #{tpu_custom_call.1} parent=31 // pred_region
          %223 = dma.done %s216, 8192
        $region36: #{tpu_custom_call.1} parent=31 // pred_fallthru
          _
        %s224 = sand.u32 %s23, 1
        %s225 = scalar_lea.sflag [#allocation7], %s224
        %s226 = sand.u32 %s71, 1
        %s227 = smul.addr %s226, 32
        %s228 = scalar_lea.vmem [#allocation6], %s227
        // Predicated region
        $region37: #{tpu_custom_call.1} parent=31 // pred_check
          %p229 = pneg %p84
        $region38: #{tpu_custom_call.1} parent=31 // pred_check_branch
          %231 = sbr.rel (%p229) target = $region40
        $region39: #{tpu_custom_call.1} parent=31 // pred_region
          %232 = dma.done %s225, 512
        $region40: #{tpu_custom_call.1} parent=31 // pred_fallthru
          _
        // Predicated region
        $region41: #{tpu_custom_call.1} parent=31 // pred_check
          %p233 = pneg %p105
        $region42: #{tpu_custom_call.1} parent=31 // pred_check_branch
          %235 = sbr.rel (%p233) target = $region44
        $region43: #{tpu_custom_call.1} parent=31 // pred_region
          %236 = dma.done [#allocation7], 4096
        $region44: #{tpu_custom_call.1} parent=31 // pred_fallthru
          _
        %s237 = sand.u32 %s45, 1
        %s238 = scalar_lea.sflag [#allocation4], %s237
        %s239 = sand.u32 %s45, 1
        %s240 = smul.addr %s239, 512
        %s241 = scalar_lea.vmem [#allocation3], %s240
        %p242 = pneg %p58
        %p243 = pneg %p55
        %s244 = sand.u32 %s23, 1
        %s245 = scalar_lea.sflag [#allocation7], %s244
        %s246 = sand.u32 %s71, 1
        %s247 = smul.addr %s246, 32
        %s248 = scalar_lea.vmem [#allocation6], %s247
        %p249 = pneg %p84
        %p250 = pneg %p81
        %p251 = pneg %p105
        %p252 = pneg %p102
        %p253 = pneg %p131
        %p254 = pneg %p128
        %s255 = sand.u32 %s118, 1
        %s256 = scalar_lea.sflag [#allocation5], %s255
        %s257 = sand.u32 %s118, 1
        %s258 = scalar_lea.vmem [#allocation9], %s257
        %s259 = smul.u32 32, %s28
        %s260 = smul.u32 2, %s28
        %p261 = scmp.eq.s32.totalorder %s28, 0
        // Predicated region
        $region45: #{tpu_custom_call.1} parent=31 // pred_check
          %p262 = pneg %p261
        $region46: #{tpu_custom_call.1} parent=31 // pred_check_branch
          %264 = sbr.rel (%p262) target = $region48
        $region47: #{tpu_custom_call.1} parent=31 // pred_region
          %265 = vst [vmem:[#allocation2] sm:$0xff] 0.0
          %266 = vst [vmem:[#allocation2 + $0x8] sm:$0xff] 0.0
          %267 = vst [vmem:[#allocation2 + $0x10] sm:$0xff] 0.0
          %268 = vst [vmem:[#allocation2 + $0x18] sm:$0xff] 0.0
        $region48: #{tpu_custom_call.1} parent=31 // pred_fallthru
          _
        %v269 = vld [vmem:[%s219] sm:$0xff]
        %v270 = vld [vmem:[%s219 + $0x8] sm:$0xff]
        %v271 = vld [vmem:[%s219 + $0x10] sm:$0xff]
        %v272 = vld [vmem:[%s219 + $0x18] sm:$0xff]
        %v273 = vld [vmem:[%s219 + $0x20] sm:$0xff]
        %v274 = vld [vmem:[%s219 + $0x28] sm:$0xff]
        %v275 = vld [vmem:[%s219 + $0x30] sm:$0xff]
        %v276 = vld [vmem:[%s219 + $0x38] sm:$0xff]
        %v277 = vld [vmem:[%s219 + $0x40] sm:$0xff]
        %v278 = vld [vmem:[%s219 + $0x48] sm:$0xff]
        %v279 = vld [vmem:[%s219 + $0x50] sm:$0xff]
        %v280 = vld [vmem:[%s219 + $0x58] sm:$0xff]
        %v281 = vld [vmem:[%s219 + $0x60] sm:$0xff]
        %v282 = vld [vmem:[%s219 + $0x68] sm:$0xff]
        %v283 = vld [vmem:[%s219 + $0x70] sm:$0xff]
        %v284 = vld [vmem:[%s219 + $0x78] sm:$0xff]
        %v285 = vld [vmem:[%s219 + $0x80] sm:$0xff]
        %v286 = vld [vmem:[%s219 + $0x88] sm:$0xff]
        %v287 = vld [vmem:[%s219 + $0x90] sm:$0xff]
        %v288 = vld [vmem:[%s219 + $0x98] sm:$0xff]
        %v289 = vld [vmem:[%s219 + $0xa0] sm:$0xff]
        %v290 = vld [vmem:[%s219 + $0xa8] sm:$0xff]
        %v291 = vld [vmem:[%s219 + $0xb0] sm:$0xff]
        %v292 = vld [vmem:[%s219 + $0xb8] sm:$0xff]
        %v293 = vld [vmem:[%s219 + $0xc0] sm:$0xff]
        %v294 = vld [vmem:[%s219 + $0xc8] sm:$0xff]
        %v295 = vld [vmem:[%s219 + $0xd0] sm:$0xff]
        %v296 = vld [vmem:[%s219 + $0xd8] sm:$0xff]
        %v297 = vld [vmem:[%s219 + $0xe0] sm:$0xff]
        %v298 = vld [vmem:[%s219 + $0xe8] sm:$0xff]
        %v299 = vld [vmem:[%s219 + $0xf0] sm:$0xff]
        %v300 = vld [vmem:[%s219 + $0xf8] sm:$0xff]
        %v301 = vld [vmem:[%s219 + $0x100] sm:$0xff]
        %v302 = vld [vmem:[%s219 + $0x108] sm:$0xff]
        %v303 = vld [vmem:[%s219 + $0x110] sm:$0xff]
        %v304 = vld [vmem:[%s219 + $0x118] sm:$0xff]
        %v305 = vld [vmem:[%s219 + $0x120] sm:$0xff]
        %v306 = vld [vmem:[%s219 + $0x128] sm:$0xff]
        %v307 = vld [vmem:[%s219 + $0x130] sm:$0xff]
        %v308 = vld [vmem:[%s219 + $0x138] sm:$0xff]
        %v309 = vld [vmem:[%s219 + $0x140] sm:$0xff]
        %v310 = vld [vmem:[%s219 + $0x148] sm:$0xff]
        %v311 = vld [vmem:[%s219 + $0x150] sm:$0xff]
        %v312 = vld [vmem:[%s219 + $0x158] sm:$0xff]
        %v313 = vld [vmem:[%s219 + $0x160] sm:$0xff]
        %v314 = vld [vmem:[%s219 + $0x168] sm:$0xff]
        %v315 = vld [vmem:[%s219 + $0x170] sm:$0xff]
        %v316 = vld [vmem:[%s219 + $0x178] sm:$0xff]
        %v317 = vld [vmem:[%s219 + $0x180] sm:$0xff]
        %v318 = vld [vmem:[%s219 + $0x188] sm:$0xff]
        %v319 = vld [vmem:[%s219 + $0x190] sm:$0xff]
        %v320 = vld [vmem:[%s219 + $0x198] sm:$0xff]
        %v321 = vld [vmem:[%s219 + $0x1a0] sm:$0xff]
        %v322 = vld [vmem:[%s219 + $0x1a8] sm:$0xff]
        %v323 = vld [vmem:[%s219 + $0x1b0] sm:$0xff]
        %v324 = vld [vmem:[%s219 + $0x1b8] sm:$0xff]
        %v325 = vld [vmem:[%s219 + $0x1c0] sm:$0xff]
        %v326 = vld [vmem:[%s219 + $0x1c8] sm:$0xff]
        %v327 = vld [vmem:[%s219 + $0x1d0] sm:$0xff]
        %v328 = vld [vmem:[%s219 + $0x1d8] sm:$0xff]
        %v329 = vld [vmem:[%s219 + $0x1e0] sm:$0xff]
        %v330 = vld [vmem:[%s219 + $0x1e8] sm:$0xff]
        %v331 = vld [vmem:[%s219 + $0x1f0] sm:$0xff]
        %v332 = vld [vmem:[%s219 + $0x1f8] sm:$0xff]
        %v333 = vld [vmem:[%s228] sm:$0xff]
        %v334 = vld [vmem:[%s228 + $0x8] sm:$0xff]
        %v335 = vld [vmem:[%s228 + $0x10] sm:$0xff]
        %v336 = vld [vmem:[%s228 + $0x18] sm:$0xff]
        %337 = vrot.lane.b32.xlu0 %v269, 127
        %v338 = vpop.permute.xlu0 %337
        %339 = vrot.lane.b32.xlu0 %v271, 127
        %v340 = vpop.permute.xlu0 %339
        %341 = vrot.lane.b32.xlu0 %v273, 127
        %v342 = vpop.permute.xlu0 %341
        %343 = vrot.lane.b32.xlu0 %v275, 127
        %v344 = vpop.permute.xlu0 %343
        %345 = vrot.lane.b32.xlu0 %v277, 127
        %v346 = vpop.permute.xlu0 %345
        %347 = vrot.lane.b32.xlu0 %v279, 127
        %v348 = vpop.permute.xlu0 %347
        %349 = vrot.lane.b32.xlu0 %v281, 127
        %v350 = vpop.permute.xlu0 %349
        %351 = vrot.lane.b32.xlu0 %v283, 127
        %v352 = vpop.permute.xlu0 %351
        %353 = vrot.lane.b32.xlu0 %v285, 127
        %v354 = vpop.permute.xlu0 %353
        %355 = vrot.lane.b32.xlu0 %v287, 127
        %v356 = vpop.permute.xlu0 %355
        %357 = vrot.lane.b32.xlu0 %v289, 127
        %v358 = vpop.permute.xlu0 %357
        %359 = vrot.lane.b32.xlu0 %v291, 127
        %v360 = vpop.permute.xlu0 %359
        %361 = vrot.lane.b32.xlu0 %v293, 127
        %v362 = vpop.permute.xlu0 %361
        %363 = vrot.lane.b32.xlu0 %v295, 127
        %v364 = vpop.permute.xlu0 %363
        %365 = vrot.lane.b32.xlu0 %v297, 127
        %v366 = vpop.permute.xlu0 %365
        %367 = vrot.lane.b32.xlu0 %v299, 127
        %v368 = vpop.permute.xlu0 %367
        %369 = vrot.lane.b32.xlu0 %v301, 127
        %v370 = vpop.permute.xlu0 %369
        %371 = vrot.lane.b32.xlu0 %v303, 127
        %v372 = vpop.permute.xlu0 %371
        %373 = vrot.lane.b32.xlu0 %v305, 127
        %v374 = vpop.permute.xlu0 %373
        %375 = vrot.lane.b32.xlu0 %v307, 127
        %v376 = vpop.permute.xlu0 %375
        %377 = vrot.lane.b32.xlu0 %v309, 127
        %v378 = vpop.permute.xlu0 %377
        %379 = vrot.lane.b32.xlu0 %v311, 127
        %v380 = vpop.permute.xlu0 %379
        %381 = vrot.lane.b32.xlu0 %v313, 127
        %v382 = vpop.permute.xlu0 %381
        %383 = vrot.lane.b32.xlu0 %v315, 127
        %v384 = vpop.permute.xlu0 %383
        %385 = vrot.lane.b32.xlu0 %v317, 127
        %v386 = vpop.permute.xlu0 %385
        %387 = vrot.lane.b32.xlu0 %v319, 127
        %v388 = vpop.permute.xlu0 %387
        %389 = vrot.lane.b32.xlu0 %v321, 127
        %v390 = vpop.permute.xlu0 %389
        %391 = vrot.lane.b32.xlu0 %v323, 127
        %v392 = vpop.permute.xlu0 %391
        %393 = vrot.lane.b32.xlu0 %v325, 127
        %v394 = vpop.permute.xlu0 %393
        %395 = vrot.lane.b32.xlu0 %v327, 127
        %v396 = vpop.permute.xlu0 %395
        %397 = vrot.lane.b32.xlu0 %v329, 127
        %v398 = vpop.permute.xlu0 %397
        %399 = vrot.lane.b32.xlu0 %v331, 127
        %v400 = vpop.permute.xlu0 %399
        %401 = vrot.lane.b32.xlu0 %v270, 127
        %v402 = vpop.permute.xlu0 %401
        %403 = vrot.lane.b32.xlu0 %v272, 127
        %v404 = vpop.permute.xlu0 %403
        %405 = vrot.lane.b32.xlu0 %v274, 127
        %v406 = vpop.permute.xlu0 %405
        %407 = vrot.lane.b32.xlu0 %v276, 127
        %v408 = vpop.permute.xlu0 %407
        %409 = vrot.lane.b32.xlu0 %v278, 127
        %v410 = vpop.permute.xlu0 %409
        %411 = vrot.lane.b32.xlu0 %v280, 127
        %v412 = vpop.permute.xlu0 %411
        %413 = vrot.lane.b32.xlu0 %v282, 127
        %v414 = vpop.permute.xlu0 %413
        %415 = vrot.lane.b32.xlu0 %v284, 127
        %v416 = vpop.permute.xlu0 %415
        %417 = vrot.lane.b32.xlu0 %v286, 127
        %v418 = vpop.permute.xlu0 %417
        %419 = vrot.lane.b32.xlu0 %v288, 127
        %v420 = vpop.permute.xlu0 %419
        %421 = vrot.lane.b32.xlu0 %v290, 127
        %v422 = vpop.permute.xlu0 %421
        %423 = vrot.lane.b32.xlu0 %v292, 127
        %v424 = vpop.permute.xlu0 %423
        %425 = vrot.lane.b32.xlu0 %v294, 127
        %v426 = vpop.permute.xlu0 %425
        %427 = vrot.lane.b32.xlu0 %v296, 127
        %v428 = vpop.permute.xlu0 %427
        %429 = vrot.lane.b32.xlu0 %v298, 127
        %v430 = vpop.permute.xlu0 %429
        %431 = vrot.lane.b32.xlu0 %v300, 127
        %v432 = vpop.permute.xlu0 %431
        %433 = vrot.lane.b32.xlu0 %v302, 127
        %v434 = vpop.permute.xlu0 %433
        %435 = vrot.lane.b32.xlu0 %v304, 127
        %v436 = vpop.permute.xlu0 %435
        %437 = vrot.lane.b32.xlu0 %v306, 127
        %v438 = vpop.permute.xlu0 %437
        %439 = vrot.lane.b32.xlu0 %v308, 127
        %v440 = vpop.permute.xlu0 %439
        %441 = vrot.lane.b32.xlu0 %v310, 127
        %v442 = vpop.permute.xlu0 %441
        %443 = vrot.lane.b32.xlu0 %v312, 127
        %v444 = vpop.permute.xlu0 %443
        %445 = vrot.lane.b32.xlu0 %v314, 127
        %v446 = vpop.permute.xlu0 %445
        %447 = vrot.lane.b32.xlu0 %v316, 127
        %v448 = vpop.permute.xlu0 %447
        %449 = vrot.lane.b32.xlu0 %v318, 127
        %v450 = vpop.permute.xlu0 %449
        %451 = vrot.lane.b32.xlu0 %v320, 127
        %v452 = vpop.permute.xlu0 %451
        %453 = vrot.lane.b32.xlu0 %v322, 127
        %v454 = vpop.permute.xlu0 %453
        %455 = vrot.lane.b32.xlu0 %v324, 127
        %v456 = vpop.permute.xlu0 %455
        %457 = vrot.lane.b32.xlu0 %v326, 127
        %v458 = vpop.permute.xlu0 %457
        %459 = vrot.lane.b32.xlu0 %v328, 127
        %v460 = vpop.permute.xlu0 %459
        %461 = vrot.lane.b32.xlu0 %v330, 127
        %v462 = vpop.permute.xlu0 %461
        %463 = vrot.lane.b32.xlu0 %v332, 127
        %v464 = vpop.permute.xlu0 %463
        %v465 = vlaneseq
        %v466 = vand.u32 %v465, 127
        %vm467 = vcmp.lt.s32.totalorder %v466, 127
        %v468 = vsel %vm467, %v338, %v402
        %v469 = vsel %vm467, %v340, %v404
        %v470 = vsel %vm467, %v342, %v406
        %v471 = vsel %vm467, %v344, %v408
        %v472 = vsel %vm467, %v346, %v410
        %v473 = vsel %vm467, %v348, %v412
        %v474 = vsel %vm467, %v350, %v414
        %v475 = vsel %vm467, %v352, %v416
        %v476 = vsel %vm467, %v354, %v418
        %v477 = vsel %vm467, %v356, %v420
        %v478 = vsel %vm467, %v358, %v422
        %v479 = vsel %vm467, %v360, %v424
        %v480 = vsel %vm467, %v362, %v426
        %v481 = vsel %vm467, %v364, %v428
        %v482 = vsel %vm467, %v366, %v430
        %v483 = vsel %vm467, %v368, %v432
        %v484 = vsel %vm467, %v370, %v434
        %v485 = vsel %vm467, %v372, %v436
        %v486 = vsel %vm467, %v374, %v438
        %v487 = vsel %vm467, %v376, %v440
        %v488 = vsel %vm467, %v378, %v442
        %v489 = vsel %vm467, %v380, %v444
        %v490 = vsel %vm467, %v382, %v446
        %v491 = vsel %vm467, %v384, %v448
        %v492 = vsel %vm467, %v386, %v450
        %v493 = vsel %vm467, %v388, %v452
        %v494 = vsel %vm467, %v390, %v454
        %v495 = vsel %vm467, %v392, %v456
        %v496 = vsel %vm467, %v394, %v458
        %v497 = vsel %vm467, %v396, %v460
        %v498 = vsel %vm467, %v398, %v462
        %v499 = vsel %vm467, %v400, %v464
        %v500 = vsel %vm467, %v402, %v338
        %v501 = vsel %vm467, %v404, %v340
        %v502 = vsel %vm467, %v406, %v342
        %v503 = vsel %vm467, %v408, %v344
        %v504 = vsel %vm467, %v410, %v346
        %v505 = vsel %vm467, %v412, %v348
        %v506 = vsel %vm467, %v414, %v350
        %v507 = vsel %vm467, %v416, %v352
        %v508 = vsel %vm467, %v418, %v354
        %v509 = vsel %vm467, %v420, %v356
        %v510 = vsel %vm467, %v422, %v358
        %v511 = vsel %vm467, %v424, %v360
        %v512 = vsel %vm467, %v426, %v362
        %v513 = vsel %vm467, %v428, %v364
        %v514 = vsel %vm467, %v430, %v366
        %v515 = vsel %vm467, %v432, %v368
        %v516 = vsel %vm467, %v434, %v370
        %v517 = vsel %vm467, %v436, %v372
        %v518 = vsel %vm467, %v438, %v374
        %v519 = vsel %vm467, %v440, %v376
        %v520 = vsel %vm467, %v442, %v378
        %v521 = vsel %vm467, %v444, %v380
        %v522 = vsel %vm467, %v446, %v382
        %v523 = vsel %vm467, %v448, %v384
        %v524 = vsel %vm467, %v450, %v386
        %v525 = vsel %vm467, %v452, %v388
        %v526 = vsel %vm467, %v454, %v390
        %v527 = vsel %vm467, %v456, %v392
        %v528 = vsel %vm467, %v458, %v394
        %v529 = vsel %vm467, %v460, %v396
        %v530 = vsel %vm467, %v462, %v398
        %v531 = vsel %vm467, %v464, %v400
        %v532 = vmax.f32 %v269, %v468
        %v533 = vmax.f32 %v270, %v500
        %v534 = vmax.f32 %v271, %v469
        %v535 = vmax.f32 %v272, %v501
        %v536 = vmax.f32 %v273, %v470
        %v537 = vmax.f32 %v274, %v502
        %v538 = vmax.f32 %v275, %v471
        %v539 = vmax.f32 %v276, %v503
        %v540 = vmax.f32 %v277, %v472
        %v541 = vmax.f32 %v278, %v504
        %v542 = vmax.f32 %v279, %v473
        %v543 = vmax.f32 %v280, %v505
        %v544 = vmax.f32 %v281, %v474
        %v545 = vmax.f32 %v282, %v506
        %v546 = vmax.f32 %v283, %v475
        %v547 = vmax.f32 %v284, %v507
        %v548 = vmax.f32 %v285, %v476
        %v549 = vmax.f32 %v286, %v508
        %v550 = vmax.f32 %v287, %v477
        %v551 = vmax.f32 %v288, %v509
        %v552 = vmax.f32 %v289, %v478
        %v553 = vmax.f32 %v290, %v510
        %v554 = vmax.f32 %v291, %v479
        %v555 = vmax.f32 %v292, %v511
        %v556 = vmax.f32 %v293, %v480
        %v557 = vmax.f32 %v294, %v512
        %v558 = vmax.f32 %v295, %v481
        %v559 = vmax.f32 %v296, %v513
        %v560 = vmax.f32 %v297, %v482
        %v561 = vmax.f32 %v298, %v514
        %v562 = vmax.f32 %v299, %v483
        %v563 = vmax.f32 %v300, %v515
        %v564 = vmax.f32 %v301, %v484
        %v565 = vmax.f32 %v302, %v516
        %v566 = vmax.f32 %v303, %v485
        %v567 = vmax.f32 %v304, %v517
        %v568 = vmax.f32 %v305, %v486
        %v569 = vmax.f32 %v306, %v518
        %v570 = vmax.f32 %v307, %v487
        %v571 = vmax.f32 %v308, %v519
        %v572 = vmax.f32 %v309, %v488
        %v573 = vmax.f32 %v310, %v520
        %v574 = vmax.f32 %v311, %v489
        %v575 = vmax.f32 %v312, %v521
        %v576 = vmax.f32 %v313, %v490
        %v577 = vmax.f32 %v314, %v522
        %v578 = vmax.f32 %v315, %v491
        %v579 = vmax.f32 %v316, %v523
        %v580 = vmax.f32 %v317, %v492
        %v581 = vmax.f32 %v318, %v524
        %v582 = vmax.f32 %v319, %v493
        %v583 = vmax.f32 %v320, %v525
        %v584 = vmax.f32 %v321, %v494
        %v585 = vmax.f32 %v322, %v526
        %v586 = vmax.f32 %v323, %v495
        %v587 = vmax.f32 %v324, %v527
        %v588 = vmax.f32 %v325, %v496
        %v589 = vmax.f32 %v326, %v528
        %v590 = vmax.f32 %v327, %v497
        %v591 = vmax.f32 %v328, %v529
        %v592 = vmax.f32 %v329, %v498
        %v593 = vmax.f32 %v330, %v530
        %v594 = vmax.f32 %v331, %v499
        %v595 = vmax.f32 %v332, %v531
        %v596 = vld [vmem:[#allocation2] sm:$0xff]
        %v597 = vld [vmem:[#allocation2 + $0x8] sm:$0xff]
        %v598 = vld [vmem:[#allocation2 + $0x10] sm:$0xff]
        %v599 = vld [vmem:[#allocation2 + $0x18] sm:$0xff]
        %600 = vmatprep.subr.mxu0 %v533
        %601 = vmatpush1.msra.mxu0 %v532
        %602 = vmatprep.subr.mxu0 %v535
        %603 = vmatpush1.msra.mxu0 %v534
        %604 = vmatprep.subr.mxu0 %v537
        %605 = vmatpush1.msra.mxu0 %v536
        %606 = vmatprep.subr.mxu0 %v539
        %607 = vmatpush1.msra.mxu0 %v538
        %608 = vmatprep.subr.mxu0 %v541
        %609 = vmatpush1.msra.mxu0 %v540
        %610 = vmatprep.subr.mxu0 %v543
        %611 = vmatpush1.msra.mxu0 %v542
        %612 = vmatprep.subr.mxu0 %v545
        %613 = vmatpush1.msra.mxu0 %v544
        %614 = vmatprep.subr.mxu0 %v547
        %615 = vmatpush1.msra.mxu0 %v546
        %616 = vmatprep.subr.mxu0 %v549
        %617 = vmatpush1.msra.mxu0 %v548
        %618 = vmatprep.subr.mxu0 %v551
        %619 = vmatpush1.msra.mxu0 %v550
        %620 = vmatprep.subr.mxu0 %v553
        %621 = vmatpush1.msra.mxu0 %v552
        %622 = vmatprep.subr.mxu0 %v555
        %623 = vmatpush1.msra.mxu0 %v554
        %624 = vmatprep.subr.mxu0 %v557
        %625 = vmatpush1.msra.mxu0 %v556
        %626 = vmatprep.subr.mxu0 %v559
        %627 = vmatpush1.msra.mxu0 %v558
        %628 = vmatprep.subr.mxu0 %v561
        %629 = vmatpush1.msra.mxu0 %v560
        %630 = vmatprep.subr.mxu0 %v563
        %631 = vmatpush1.msra.mxu0 %v562
        %632 = vmatprep.subr.mxu0 %v565
        %633 = vmatpush1.msra.mxu0 %v564
        %634 = vmatprep.subr.mxu0 %v567
        %635 = vmatpush1.msra.mxu0 %v566
        %636 = vmatprep.subr.mxu0 %v569
        %637 = vmatpush1.msra.mxu0 %v568
        %638 = vmatprep.subr.mxu0 %v571
        %639 = vmatpush1.msra.mxu0 %v570
        %640 = vmatprep.subr.mxu0 %v573
        %641 = vmatpush1.msra.mxu0 %v572
        %642 = vmatprep.subr.mxu0 %v575
        %643 = vmatpush1.msra.mxu0 %v574
        %644 = vmatprep.subr.mxu0 %v577
        %645 = vmatpush1.msra.mxu0 %v576
        %646 = vmatprep.subr.mxu0 %v579
        %647 = vmatpush1.msra.mxu0 %v578
        %648 = vmatprep.subr.mxu0 %v581
        %649 = vmatpush1.msra.mxu0 %v580
        %650 = vmatprep.subr.mxu0 %v583
        %651 = vmatpush1.msra.mxu0 %v582
        %652 = vmatprep.subr.mxu0 %v585
        %653 = vmatpush1.msra.mxu0 %v584
        %654 = vmatprep.subr.mxu0 %v587
        %655 = vmatpush1.msra.mxu0 %v586
        %656 = vmatprep.subr.mxu0 %v589
        %657 = vmatpush1.msra.mxu0 %v588
        %658 = vmatprep.subr.mxu0 %v591
        %659 = vmatpush1.msra.mxu0 %v590
        %660 = vmatprep.subr.mxu0 %v593
        %661 = vmatpush1.msra.mxu0 %v592
        %662 = vmatprep.subr.mxu0 %v595
        %663 = vmatpush1.msra.mxu0 %v594
        %664 = vmatprep.mubr.f32.mxu0 %v334
        %665 = vmatmul.mubr.f32.gmra.mrb[0].mxu0 %v333
        %v666 = vpop.f32.mrb[0].mxu0
        %v667 = vadd.f32 0.0, %v666
        %v668 = vpop.f32.mrb[0].mxu0
        %v669 = vadd.f32 0.0, %v668
        %670 = vmatprep.mubr.f32.mxu0 %v336
        %671 = vmatmul.mubr.f32.gmra.mrb[0].mxu0 %v335
        %v672 = vpop.f32.mrb[0].mxu0
        %v673 = vadd.f32 0.0, %v672
        %v674 = vpop.f32.mrb[0].mxu0
        %v675 = vadd.f32 0.0, %v674
        %676 = vdwg.mxu0
        %v677 = vadd.f32 %v596, %v667
        %v678 = vadd.f32 %v597, %v669
        %v679 = vadd.f32 %v598, %v673
        %v680 = vadd.f32 %v599, %v675
        %681 = vst [vmem:[#allocation2] sm:$0xff] %v677
        %682 = vst [vmem:[#allocation2 + $0x8] sm:$0xff] %v678
        %683 = vst [vmem:[#allocation2 + $0x10] sm:$0xff] %v679
        %684 = vst [vmem:[#allocation2 + $0x18] sm:$0xff] %v680
        %p685 = scmp.eq.s32.totalorder %s28, 3
        // Predicated region
        $region49: #{tpu_custom_call.1} parent=31 // pred_check
          %p686 = pneg %p685
        $region50: #{tpu_custom_call.1} parent=31 // pred_check_branch
          %688 = sbr.rel (%p686) target = $region52
        $region51: #{tpu_custom_call.1} parent=31 // pred_region
          %v689 = vld [vmem:[#allocation2] sm:$0xff]
          %v690 = vld [vmem:[#allocation2 + $0x8] sm:$0xff]
          %v691 = vld [vmem:[#allocation2 + $0x10] sm:$0xff]
          %v692 = vld [vmem:[#allocation2 + $0x18] sm:$0xff]
          %v693 = vld [vmem:[#allocation8] sm:$0xff]
          %v694 = vld [vmem:[#allocation8 + $0x8] sm:$0xff]
          %v695 = vld [vmem:[#allocation8 + $0x10] sm:$0xff]
          %v696 = vld [vmem:[#allocation8 + $0x18] sm:$0xff]
          %v697 = vld [vmem:[#allocation8 + $0x20] sm:$0xff]
          %v698 = vld [vmem:[#allocation8 + $0x28] sm:$0xff]
          %v699 = vld [vmem:[#allocation8 + $0x30] sm:$0xff]
          %v700 = vld [vmem:[#allocation8 + $0x38] sm:$0xff]
          %v701 = vld [vmem:[#allocation8 + $0x40] sm:$0xff]
          %v702 = vld [vmem:[#allocation8 + $0x48] sm:$0xff]
          %v703 = vld [vmem:[#allocation8 + $0x50] sm:$0xff]
          %v704 = vld [vmem:[#allocation8 + $0x58] sm:$0xff]
          %v705 = vld [vmem:[#allocation8 + $0x60] sm:$0xff]
          %v706 = vld [vmem:[#allocation8 + $0x68] sm:$0xff]
          %v707 = vld [vmem:[#allocation8 + $0x70] sm:$0xff]
          %v708 = vld [vmem:[#allocation8 + $0x78] sm:$0xff]
          %v709 = vld [vmem:[#allocation8 + $0x80] sm:$0xff]
          %v710 = vld [vmem:[#allocation8 + $0x88] sm:$0xff]
          %v711 = vld [vmem:[#allocation8 + $0x90] sm:$0xff]
          %v712 = vld [vmem:[#allocation8 + $0x98] sm:$0xff]
          %v713 = vld [vmem:[#allocation8 + $0xa0] sm:$0xff]
          %v714 = vld [vmem:[#allocation8 + $0xa8] sm:$0xff]
          %v715 = vld [vmem:[#allocation8 + $0xb0] sm:$0xff]
          %v716 = vld [vmem:[#allocation8 + $0xb8] sm:$0xff]
          %v717 = vld [vmem:[#allocation8 + $0xc0] sm:$0xff]
          %v718 = vld [vmem:[#allocation8 + $0xc8] sm:$0xff]
          %v719 = vld [vmem:[#allocation8 + $0xd0] sm:$0xff]
          %v720 = vld [vmem:[#allocation8 + $0xd8] sm:$0xff]
          %v721 = vld [vmem:[#allocation8 + $0xe0] sm:$0xff]
          %v722 = vld [vmem:[#allocation8 + $0xe8] sm:$0xff]
          %v723 = vld [vmem:[#allocation8 + $0xf0] sm:$0xff]
          %v724 = vld [vmem:[#allocation8 + $0xf8] sm:$0xff]
          %725 = vmatprep.subr.mxu0 0.0
          %726 = vmatpush1.msra.mxu0 %v693
          %727 = vmatprep.subr.mxu0 0.0
          %728 = vmatpush1.msra.mxu0 %v694
          %729 = vmatprep.subr.mxu0 0.0
          %730 = vmatpush1.msra.mxu0 %v695
          %731 = vmatprep.subr.mxu0 0.0
          %732 = vmatpush1.msra.mxu0 %v696
          %733 = vmatprep.subr.mxu0 0.0
          %734 = vmatpush1.msra.mxu0 %v697
          %735 = vmatprep.subr.mxu0 0.0
          %736 = vmatpush1.msra.mxu0 %v698
          %737 = vmatprep.subr.mxu0 0.0
          %738 = vmatpush1.msra.mxu0 %v699
          %739 = vmatprep.subr.mxu0 0.0
          %740 = vmatpush1.msra.mxu0 %v700
          %741 = vmatprep.subr.mxu0 0.0
          %742 = vmatpush1.msra.mxu0 %v701
          %743 = vmatprep.subr.mxu0 0.0
          %744 = vmatpush1.msra.mxu0 %v702
          %745 = vmatprep.subr.mxu0 0.0
          %746 = vmatpush1.msra.mxu0 %v703
          %747 = vmatprep.subr.mxu0 0.0
          %748 = vmatpush1.msra.mxu0 %v704
          %749 = vmatprep.subr.mxu0 0.0
          %750 = vmatpush1.msra.mxu0 %v705
          %751 = vmatprep.subr.mxu0 0.0
          %752 = vmatpush1.msra.mxu0 %v706
          %753 = vmatprep.subr.mxu0 0.0
          %754 = vmatpush1.msra.mxu0 %v707
          %755 = vmatprep.subr.mxu0 0.0
          %756 = vmatpush1.msra.mxu0 %v708
          %757 = vmatprep.subr.mxu0 0.0
          %758 = vmatpush1.msra.mxu0 %v709
          %759 = vmatprep.subr.mxu0 0.0
          %760 = vmatpush1.msra.mxu0 %v710
          %761 = vmatprep.subr.mxu0 0.0
          %762 = vmatpush1.msra.mxu0 %v711
          %763 = vmatprep.subr.mxu0 0.0
          %764 = vmatpush1.msra.mxu0 %v712
          %765 = vmatprep.subr.mxu0 0.0
          %766 = vmatpush1.msra.mxu0 %v713
          %767 = vmatprep.subr.mxu0 0.0
          %768 = vmatpush1.msra.mxu0 %v714
          %769 = vmatprep.subr.mxu0 0.0
          %770 = vmatpush1.msra.mxu0 %v715
          %771 = vmatprep.subr.mxu0 0.0
          %772 = vmatpush1.msra.mxu0 %v716
          %773 = vmatprep.subr.mxu0 0.0
          %774 = vmatpush1.msra.mxu0 %v717
          %775 = vmatprep.subr.mxu0 0.0
          %776 = vmatpush1.msra.mxu0 %v718
          %777 = vmatprep.subr.mxu0 0.0
          %778 = vmatpush1.msra.mxu0 %v719
          %779 = vmatprep.subr.mxu0 0.0
          %780 = vmatpush1.msra.mxu0 %v720
          %781 = vmatprep.subr.mxu0 0.0
          %782 = vmatpush1.msra.mxu0 %v721
          %783 = vmatprep.subr.mxu0 0.0
          %784 = vmatpush1.msra.mxu0 %v722
          %785 = vmatprep.subr.mxu0 0.0
          %786 = vmatpush1.msra.mxu0 %v723
          %787 = vmatprep.subr.mxu0 0.0
          %788 = vmatpush1.msra.mxu0 %v724
          %789 = vmatprep.mubr.f32.mxu0 %v690
          %790 = vmatmul.mubr.f32.gmra.mrb[0].mxu0 %v689
          %v791 = vpop.f32.mrb[0].mxu0
          %v792 = vadd.f32 0.0, %v791
          %v793 = vpop.f32.mrb[0].mxu0
          %794 = vmatprep.mubr.f32.mxu0 %v692
          %795 = vmatmul.mubr.f32.gmra.mrb[0].mxu0 %v691
          %v796 = vpop.f32.mrb[0].mxu0
          %v797 = vadd.f32 0.0, %v796
          %v798 = vpop.f32.mrb[0].mxu0
          %799 = vdwg.mxu0
          %801 = vrot.lane.b32.xlu0 %v792, 256
          %v802 = vpop.permute.xlu0 %801
          %s804 = sor.u32 256, 8
          %805 = vrot.lane.b32.xlu0 %v797, %s804
          %v806 = vpop.permute.xlu0 %805
          %v807 = vlaneseq
          %v808 = vshrl.u32 %v807, 7
          %v809 = vadd.s32 %v808, 8
          %vm810 = vcmp.ge.s32.totalorder %v466, %v808
          %vm811 = vcmp.ge.s32.totalorder %v466, %v809
          %v812 = vsel %vm810, %v802, 0.0
          %v813 = vsel %vm811, %v806, 0.0
          %v814 = vadd.f32 %v812, %v813
          %v815 = vrot.slane %v814, 4
          %v816 = vadd.f32 %v814, %v815
          %v817 = vrot.slane %v816, 2
          %v818 = vadd.f32 %v816, %v817
          %v819 = vrot.slane %v818, 1
          %v820 = vadd.f32 %v818, %v819
          %821 = vst [vmem:[%s258] sm:$0x1] %v820
        $region52: #{tpu_custom_call.1} parent=31 // pred_fallthru
          _
        %s822 = sand.u32 %s118, 1
        %s823 = scalar_lea.sflag [#allocation5], %s822
        %s824 = sand.u32 %s118, 1
        %s825 = scalar_lea.vmem [#allocation9], %s824
        // Predicated region
        $region53: #{tpu_custom_call.1} parent=31 // pred_check
          %p826 = pneg %p128
        $region54: #{tpu_custom_call.1} parent=31 // pred_check_branch
          %828 = sbr.rel (%p826) target = $region56
        $region55: #{tpu_custom_call.1} parent=31 // pred_region
          %s830 = ssub.s32 16, 16
          %831 = vsyncadd %s823, %s830
          %s832 = smul.addr %s27, 16
          %s833 = scalar_lea.hbm %s3, %s832
          %s835 = sshll.u32 %s825, 4
          %s836 = int_to_ptr.vmem [resolvable:$true] %s835
          %838 = dma.vmem_to_hbm [thread:$0]  %s836, 16, %s833, %s823
        $region56: #{tpu_custom_call.1} parent=31 // pred_fallthru
          _
      $region32: #{tpu_custom_call.1} parent=5 // pred_fallthru
        _
      %p839 = scmp.le.s32.totalorder 2, %s18
      // Predicated region
      $region57: #{tpu_custom_call.1} parent=5 // pred_check
        %p840 = pneg %p839
      $region58: #{tpu_custom_call.1} parent=5 // pred_check_branch
        %842 = sbr.rel (%p840) target = $region60
      $region59: #{tpu_custom_call.1} parent=5 // pred_region
        %s843 = ssub.s32 %s18, 2
        // Predicated region
        $region61: #{tpu_custom_call.1} parent=59 // pred_check
          %p844 = pneg %p134
        $region62: #{tpu_custom_call.1} parent=59 // pred_check_branch
          %846 = sbr.rel (%p844) target = $region64
        $region63: #{tpu_custom_call.1} parent=59 // pred_region
          %s847 = sand.u32 %s119, 1
          %s848 = scalar_lea.sflag [#allocation5], %s847
          %s849 = sand.u32 %s119, 1
          %s850 = scalar_lea.vmem [#allocation9], %s849
          %851 = dma.done %s848, 16
        $region64: #{tpu_custom_call.1} parent=59 // pred_fallthru
          _
      $region60: #{tpu_custom_call.1} parent=5 // pred_fallthru
        _
    $region6: #{tpu_custom_call.1} parent=1 // loop_footer
      %s22 = sadd.s32 1, %s18
    $region7: #{tpu_custom_call.1} parent=1 // loop_footer_branch
      %17 = sbr.rel target = $region3
    $region8: #{tpu_custom_call.1} parent=1 // loop_exit
      _
    %852 = vsyncpa [#allocation4], 1
    %s853 = scalar_lea.sflag [#allocation4], 1
    %854 = vsyncpa %s853, 1
    %855 = vsyncpa [#allocation7], 1
    %s856 = scalar_lea.sflag [#allocation7], 1
    %857 = vsyncpa %s856, 1
    %858 = vsyncpa [#allocation5], 1
    %s859 = scalar_lea.sflag [#allocation5], 1
    %860 = vsyncpa %s859, 1

</llo_original>
